<compile_context>
chip_gen: v7x
topology: tpu7x:2x2x1
jax: 0.10.0
libtpu: 0.0.40
codegen_flags: <defaults>
</compile_context>

<pallas_src>
import functools

import jax
import jax.numpy as jnp
from jax.experimental import pallas as pl
from jax.experimental.pallas import tpu as pltpu


_MIB = 1 << 20
_VMEM_BUDGET = 56 * _MIB      # conservative working-set budget (fits v7x 64 MiB)
_VMEM_HEADROOM = 4 * _MIB


def _ceil_to(x: int, m: int) -> int:
    return ((x + m - 1) // m) * m


def _estimate_vmem(tm, tmm, n_dim, x_bytes, w_bytes, lat_bytes, cmp_bytes, aux):
    """Rough per-step VMEM footprint (double-buffered tiles + scratch)."""
    buf = 2
    total = buf * tm * n_dim * x_bytes              # x tile
    total += buf * n_dim * tmm * w_bytes            # enc_w tile
    total += buf * 8 * max(tmm, 128) * 4            # enc_b tile (layout-padded)
    total += buf * 8 * max(n_dim, 128) * 4          # dec_b tile
    total += buf * tm * tmm * lat_bytes             # latent output tile
    if aux:
        total += buf * tmm * n_dim * w_bytes        # dec_w tile
        total += buf * 2 * 8 * 128 * 4              # l1/l2 partial outputs
        total += tm * n_dim * cmp_bytes             # x_prime scratch
        total += tm * n_dim * 4                     # xhat f32 accumulator
        total += tm * 128 * 4                       # l1 row accumulator (lane pad)
    return total


# ----------------------------------------------------------------------------
# Kernels
# ----------------------------------------------------------------------------
def _sae_aux_kernel(x_ref, enc_w_ref, enc_b_ref, dec_w_ref, dec_b_ref,
                    latent_ref, l2_ref, l1_ref,
                    xp_scratch, xhat_acc, l1_acc,
                    *, n_valid_tokens, mask_rows):
    """Grid = (token_tile i [parallel], m_tile j [arbitrary]).

    x_ref      : [TM, n]      hidden-state tile (block constant across j)
    enc_w_ref  : [n, Tm]      encoder weight tile (pre-transposed, compute dtype)
    enc_b_ref  : [1, Tm]      encoder bias tile (f32)
    dec_w_ref  : [Tm, n]      decoder weight tile (pre-transposed, compute dtype)
    dec_b_ref  : [1, n]       decoder bias (f32, resident)
    latent_ref : [TM, Tm]     latent output tile
    l2_ref     : [1, 8, 128]  per-token-tile L2 partial sum (lane-dense)
    l1_ref     : [1, 8, 128]  per-token-tile L1 partial sum (lane-dense)
    xp_scratch : [TM, n]      x_prime in compute dtype (hoisted, j==0)
    xhat_acc   : [TM, n] f32  x_hat accumulator (over m tiles)
    l1_acc     : [TM, 1] f32  per-row latent-sum accumulator (over m tiles)
    """
    i = pl.program_id(0)
    j = pl.program_id(1)

    @pl.when(j == 0)
    def _():
        # Hoisted once per token tile: f32 bias-subtract, cast to compute dtype.
        x_f32 = x_ref[...].astype(jnp.float32)
        xp_scratch[...] = (x_f32 - dec_b_ref[...].astype(jnp.float32)
                           ).astype(xp_scratch.dtype)
        xhat_acc[...] = jnp.zeros_like(xhat_acc)
        l1_acc[...] = jnp.zeros_like(l1_acc)

    # Encoder: bf16 (or f32) operands on the MXU, f32 accumulation.
    pre = jnp.dot(xp_scratch[...], enc_w_ref[...],
                  preferred_element_type=jnp.float32)
    latent = jnp.maximum(pre + enc_b_ref[...].astype(jnp.float32), 0.0)
    latent_ref[...] = latent.astype(latent_ref.dtype)

    # L1 partial per row: ReLU output is non-negative -> plain sum, no abs.
    l1_acc[...] += jnp.sum(latent, axis=1, keepdims=True)

    # Decoder: accumulate this m tile's x_hat contribution.
    xhat_acc[...] += jnp.dot(latent.astype(dec_w_ref.dtype), dec_w_ref[...],
                             preferred_element_type=jnp.float32)

    @pl.when(j == pl.num_programs(1) - 1)
    def _():
        x_f32 = x_ref[...].astype(jnp.float32)
        x_hat = xhat_acc[...] + dec_b_ref[...].astype(jnp.float32)
        diff = x_f32 - x_hat
        l1_rows = l1_acc[...]
        if mask_rows:  # trace-time branch: mask out padded token rows
            tm_rows = diff.shape[0]
            row_ids = i * tm_rows + jax.lax.broadcasted_iota(
                jnp.int32, (tm_rows, 1), 0)
            row_mask = (row_ids < n_valid_tokens).astype(jnp.float32)
            diff = diff * row_mask
            l1_rows = l1_rows * row_mask
        l2_val = jnp.sum(diff * diff)      # partial SUM; normalized in wrapper
        l1_val = jnp.sum(l1_rows)          # partial SUM; normalized in wrapper
        l2_ref[...] = jnp.broadcast_to(l2_val, l2_ref.shape)
        l1_ref[...] = jnp.broadcast_to(l1_val, l1_ref.shape)


def _sae_encode_kernel(x_ref, enc_w_ref, enc_b_ref, dec_b_ref, latent_ref,
                       *, compute_dtype):
    """Encoder-only path (output_auxiliary=False); both grid axes parallel."""
    x_f32 = x_ref[...].astype(jnp.float32)
    x_prime = (x_f32 - dec_b_ref[...].astype(jnp.float32)).astype(compute_dtype)
    pre = jnp.dot(x_prime, enc_w_ref[...], preferred_element_type=jnp.float32)
    latent = jnp.maximum(pre + enc_b_ref[...].astype(jnp.float32), 0.0)
    latent_ref[...] = latent.astype(latent_ref.dtype)


# ----------------------------------------------------------------------------
# Wrapper
# ----------------------------------------------------------------------------
@functools.partial(jax.jit,
                   static_argnames=("output_auxiliary", "block_tokens",
                                    "block_m", "compute_dtype", "latent_dtype"))
def lswt_sae_forward(hidden_states, encoder_weight, encoder_bias,
                     decoder_weight, decoder_bias, output_auxiliary=True,
                     block_tokens=512, block_m=512,
                     compute_dtype=jnp.bfloat16, latent_dtype=None):
    """hidden_states: [B, T, n_dim]; weights match the PyTorch module shapes:
       encoder_weight [m, n], encoder_bias [m], decoder_weight [n, m],
       decoder_bias [n].

       compute_dtype: MXU operand dtype for the matmuls (weights + x_prime +
       re-quantized latent).  f32 accumulation is kept regardless.
       latent_dtype:  dtype of the returned latent (None -> hidden dtype)."""
    B, T, n_dim = hidden_states.shape
    m_dim = encoder_weight.shape[0]
    N = B * T
    lat_dtype = hidden_states.dtype if latent_dtype is None else latent_dtype

    x_bytes = jnp.dtype(hidden_states.dtype).itemsize
    w_bytes = jnp.dtype(compute_dtype).itemsize
    lat_bytes = jnp.dtype(lat_dtype).itemsize
    cmp_bytes = w_bytes

    # --- tile selection -------------------------------------------------
    # TM: tokens/step (mult of 8).  Guarantee >= 2 token blocks so the
    # parallel axis can shard across TensorCores (v7x megacore).
    tm = min(block_tokens, _ceil_to(N, 8))
    if N > 8 and _ceil_to(N, tm) // tm < 2:
        tm = _ceil_to(-(-N // 2), 8)

    # Tm: m-lanes/step (mult of 128).  Encoder-only path gets a wider tile
    # (no dec_w tile / xhat scratch in VMEM).
    base_block_m = block_m if output_auxiliary else max(block_m, 1024)
    tmm = min(base_block_m, _ceil_to(m_dim, 128))

    # Shrink tiles until the double-buffered working set fits the VMEM budget
    # (56 MiB: safe for v7x's 64 MiB physical VMEM; v5e/v6e have 128 MiB).
    def est(tm_, tmm_):
        return _estimate_vmem(tm_, tmm_, n_dim, x_bytes, w_bytes, lat_bytes,
                              cmp_bytes, output_auxiliary)
    while est(tm, tmm) > _VMEM_BUDGET and tmm > 128:
        tmm = max(128, _ceil_to(tmm // 2, 128))
    while est(tm, tmm) > _VMEM_BUDGET and tm > 8:
        tm = max(8, _ceil_to(tm // 2, 8))

    n_tok_pad = _ceil_to(N, tm)
    m_pad = _ceil_to(m_dim, tmm)
    num_i = n_tok_pad // tm
    num_j = m_pad // tmm

    vmem_limit = int(min(60 * _MIB,
                         max(32 * _MIB, est(tm, tmm) + _VMEM_HEADROOM)))

    # --- layout plumbing (plain JAX): flatten, transpose, cast, pad ------
    x2d = hidden_states.reshape(N, n_dim)
    if n_tok_pad != N:
        x2d = jnp.pad(x2d, ((0, n_tok_pad - N), (0, 0)))
    enc_w_t = encoder_weight.T.astype(compute_dtype)        # [n, m]
    dec_w_t = decoder_weight.T.astype(compute_dtype)        # [m, n]
    enc_b_row = encoder_bias.reshape(1, m_dim).astype(jnp.float32)
    if m_pad != m_dim:
        # Zero padding keeps relu(0 @ W + 0) == 0: padded latent columns are
        # exactly zero, so l1 / x_hat are unaffected.
        enc_w_t = jnp.pad(enc_w_t, ((0, 0), (0, m_pad - m_dim)))
        dec_w_t = jnp.pad(dec_w_t, ((0, m_pad - m_dim), (0, 0)))
        enc_b_row = jnp.pad(enc_b_row, ((0, 0), (0, m_pad - m_dim)))
    dec_b_row = decoder_bias.reshape(1, n_dim).astype(jnp.float32)

    x_spec = pl.BlockSpec((tm, n_dim), lambda i, j: (i, 0))
    enc_w_spec = pl.BlockSpec((n_dim, tmm), lambda i, j: (0, j))
    enc_b_spec = pl.BlockSpec((1, tmm), lambda i, j: (0, j))
    dec_w_spec = pl.BlockSpec((tmm, n_dim), lambda i, j: (j, 0))
    dec_b_spec = pl.BlockSpec((1, n_dim), lambda i, j: (0, 0))
    latent_spec = pl.BlockSpec((tm, tmm), lambda i, j: (i, j))

    if not output_auxiliary:
        latent_pad = pl.pallas_call(
            functools.partial(_sae_encode_kernel, compute_dtype=compute_dtype),
            out_shape=jax.ShapeDtypeStruct((n_tok_pad, m_pad), lat_dtype),
            grid_spec=pltpu.PrefetchScalarGridSpec(
                num_scalar_prefetch=0,
                grid=(num_i, num_j),
                in_specs=[x_spec, enc_w_spec, enc_b_spec, dec_b_spec],
                out_specs=latent_spec,
            ),
            compiler_params=pltpu.CompilerParams(
                dimension_semantics=("parallel", "parallel"),
                vmem_limit_bytes=vmem_limit),
        )(x2d, enc_w_t, enc_b_row, dec_b_row)
        return latent_pad[:N, :m_dim].reshape(B, T, m_dim)

    kernel = functools.partial(_sae_aux_kernel,
                               n_valid_tokens=N,
                               mask_rows=(n_tok_pad != N))

    out_shapes = (
        jax.ShapeDtypeStruct((n_tok_pad, m_pad), lat_dtype),     # latent
        jax.ShapeDtypeStruct((num_i, 8, 128), jnp.float32),      # l2 partials
        jax.ShapeDtypeStruct((num_i, 8, 128), jnp.float32),      # l1 partials
    )
    loss_spec = pl.BlockSpec((1, 8, 128), lambda i, j: (i, 0, 0))

    latent_pad, l2_part, l1_part = pl.pallas_call(
        kernel,
        out_shape=out_shapes,
        grid_spec=pltpu.PrefetchScalarGridSpec(
            num_scalar_prefetch=0,
            grid=(num_i, num_j),
            in_specs=[x_spec, enc_w_spec, enc_b_spec, dec_w_spec, dec_b_spec],
            out_specs=(latent_spec, loss_spec, loss_spec),
            scratch_shapes=[
                pltpu.VMEM((tm, n_dim), compute_dtype),   # x_prime (hoisted)
                pltpu.VMEM((tm, n_dim), jnp.float32),     # x_hat accumulator
                pltpu.VMEM((tm, 1), jnp.float32),         # per-row l1 accumulator
            ],
        ),
        compiler_params=pltpu.CompilerParams(
            dimension_semantics=("parallel", "arbitrary"),
            vmem_limit_bytes=vmem_limit),
    )(x2d, enc_w_t, enc_b_row, dec_w_t, dec_b_row)

    latent = latent_pad[:N, :m_dim].reshape(B, T, m_dim)
    l2 = jnp.sum(l2_part[:, 0, 0]) / (N * n_dim)
    l1 = jnp.sum(l1_part[:, 0, 0]) / N
    return latent, (l2, l1)


# ----------------------------------------------------------------------------
# Pure-JAX reference (mirrors the PyTorch forward, relu activation)
# ----------------------------------------------------------------------------
def _reference_forward(hidden_states, enc_w, enc_b, dec_w, dec_b):
    x = hidden_states.astype(jnp.float32)
    x_prime = x - dec_b
    latent = jax.nn.relu(
        jnp.einsum("btn,mn->btm", x_prime, enc_w,
                   precision=jax.lax.Precision.HIGHEST) + enc_b)
    x_hat = jnp.einsum("btm,nm->btn", latent, dec_w,
                       precision=jax.lax.Precision.HIGHEST) + dec_b
    l2 = jnp.mean((x - x_hat) ** 2)
    l1 = jnp.mean(jnp.sum(jnp.abs(latent), axis=-1))
    return latent, l2, l1


def _make_inputs(key, B, T, n_dim, m_dim):
    k_x, k_ew, k_eb, k_dw, k_db = jax.random.split(key, 5)
    hidden_states = jax.random.normal(k_x, (B, T, n_dim), dtype=jnp.float32)
    encoder_weight = jax.random.normal(k_ew, (m_dim, n_dim), dtype=jnp.float32) * 0.1
    encoder_bias = jax.random.normal(k_eb, (m_dim,), dtype=jnp.float32) * 0.1
    decoder_weight = jax.random.normal(k_dw, (n_dim, m_dim), dtype=jnp.float32) * 0.1
    decoder_bias = jax.random.normal(k_db, (n_dim,), dtype=jnp.float32) * 0.1
    return hidden_states, encoder_weight, encoder_bias, decoder_weight, decoder_bias


if __name__ == "__main__":
    key = jax.random.PRNGKey(0)
    k1, k2 = jax.random.split(key)

    # --- Test 1: small module-consistent shapes, f32 compute (exact path) ---
    B, T, n_dim, m_dim = 2, 8, 32, 64
    hs, ew, eb, dw, db = _make_inputs(k1, B, T, n_dim, m_dim)

    latent, (l2, l1) = lswt_sae_forward(hs, ew, eb, dw, db,
                                        output_auxiliary=True,
                                        compute_dtype=jnp.float32)
    jax.block_until_ready((latent, l2, l1))

    ref_latent, ref_l2, ref_l1 = _reference_forward(hs, ew, eb, dw, db)
    assert jnp.allclose(latent, ref_latent, atol=1e-4, rtol=1e-4)
    assert jnp.allclose(l2, ref_l2, atol=1e-4, rtol=1e-4)
    assert jnp.allclose(l1, ref_l1, atol=1e-4, rtol=1e-4)

    latent_only = lswt_sae_forward(hs, ew, eb, dw, db, output_auxiliary=False,
                                   compute_dtype=jnp.float32)
    jax.block_until_ready(latent_only)
    assert jnp.allclose(latent_only, ref_latent, atol=1e-4, rtol=1e-4)

    # --- Test 2: multi-tile grid (token padding + m reduction), f32 compute ---
    B2, T2, n2, m2 = 2, 500, 256, 768      # N=1000 -> padded to 1024 with TM=512
    hs2, ew2, eb2, dw2, db2 = _make_inputs(k2, B2, T2, n2, m2)
    ref_latent2, ref_l2_2, ref_l1_2 = _reference_forward(hs2, ew2, eb2, dw2, db2)

    latent2, (l2_2, l1_2) = lswt_sae_forward(
        hs2, ew2, eb2, dw2, db2, output_auxiliary=True,
        block_tokens=512, block_m=512, compute_dtype=jnp.float32)
    jax.block_until_ready((latent2, l2_2, l1_2))
    assert jnp.allclose(latent2, ref_latent2, atol=2e-3, rtol=2e-3)
    assert jnp.allclose(l2_2, ref_l2_2, atol=2e-3, rtol=2e-3)
    assert jnp.allclose(l1_2, ref_l1_2, atol=2e-3, rtol=2e-3)

    # --- Test 3: same shapes, default bf16 compute (perf path, looser tol) ---
    latent3, (l2_3, l1_3) = lswt_sae_forward(
        hs2, ew2, eb2, dw2, db2, output_auxiliary=True)
    jax.block_until_ready((latent3, l2_3, l1_3))
    assert jnp.allclose(latent3, ref_latent2, atol=7e-2, rtol=7e-2)
    assert jnp.allclose(l2_3, ref_l2_2, atol=7e-2, rtol=7e-2)
    assert jnp.allclose(l1_3, ref_l1_2, atol=7e-2, rtol=7e-2)

    latent_only3 = lswt_sae_forward(hs2, ew2, eb2, dw2, db2,
                                    output_auxiliary=False)
    jax.block_until_ready(latent_only3)
    assert jnp.allclose(latent_only3, ref_latent2, atol=7e-2, rtol=7e-2)

    print("KERNEL_OK")
</pallas_src>

<mosaic_0001>
module attributes {stable_mosaic.version = 11 : i64} {
  func.func @_sae_aux_kernel(%arg0: i32, %arg1: i32, %arg2: memref<8x32xf32, #tpu.memory_space<vmem>>, %arg3: memref<32x128xf32, #tpu.memory_space<vmem>>, %arg4: memref<1x128xf32, #tpu.memory_space<vmem>>, %arg5: memref<128x32xf32, #tpu.memory_space<vmem>>, %arg6: memref<1x32xf32, #tpu.memory_space<vmem>>, %arg7: memref<8x128xf32, #tpu.memory_space<vmem>>, %arg8: memref<1x8x128xf32, #tpu.memory_space<vmem>>, %arg9: memref<1x8x128xf32, #tpu.memory_space<vmem>>, %arg10: memref<8x32xf32, #tpu.memory_space<vmem>>, %arg11: memref<8x32xf32, #tpu.memory_space<vmem>>, %arg12: memref<8x1xf32, #tpu.memory_space<vmem>>) attributes {dimension_semantics = [#tpu.dimension_semantics<parallel>, #tpu.dimension_semantics<arbitrary>], iteration_bounds = array<i64: 2, 1>, scalar_prefetch = 0 : i64, scratch_operands = 3 : i64, tpu.core_type = #tpu.core_type<tc>, window_params = [{transform_indices = @transform_0, window_bounds = array<i64: 8, 32>}, {transform_indices = @transform_1, window_bounds = array<i64: 32, 128>}, {transform_indices = @transform_2, window_bounds = array<i64: 1, 128>}, {transform_indices = @transform_3, window_bounds = array<i64: 128, 32>}, {pipeline_mode = #tpu.pipeline_mode<synchronous>, transform_indices = @transform_4, window_bounds = array<i64: 1, 32>}, {transform_indices = @transform_5, window_bounds = array<i64: 8, 128>}, {transform_indices = @transform_6, window_bounds = array<i64: 1, 8, 128>}, {transform_indices = @transform_7, window_bounds = array<i64: 1, 8, 128>}]} {
    %c0_i32 = arith.constant 0 : i32
    %0 = arith.cmpi eq, %arg1, %c0_i32 : i32
    %1 = arith.extui %0 : i1 to i32
    %c0_i32_0 = arith.constant 0 : i32
    %2 = arith.cmpi ne, %1, %c0_i32_0 : i32
    scf.if %2 {
      %c0_23 = arith.constant 0 : index
      %c0_24 = arith.constant 0 : index
      %25 = vector.load %arg2[%c0_23, %c0_24] : memref<8x32xf32, #tpu.memory_space<vmem>>, vector<8x32xf32>
      %c0_25 = arith.constant 0 : index
      %c0_26 = arith.constant 0 : index
      %26 = vector.load %arg6[%c0_25, %c0_26] : memref<1x32xf32, #tpu.memory_space<vmem>>, vector<1x32xf32>
      %27 = vector.broadcast %26 : vector<1x32xf32> to vector<8x32xf32>
      %28 = arith.subf %25, %27 : vector<8x32xf32>
      %c0_27 = arith.constant 0 : index
      %c0_28 = arith.constant 0 : index
      %29 = vector.load %arg10[%c0_27, %c0_28] : memref<8x32xf32, #tpu.memory_space<vmem>>, vector<8x32xf32>
      tpu.vector_store %arg10[%c0_27, %c0_28], %28 {strides = array<i32>} : memref<8x32xf32, #tpu.memory_space<vmem>>, vector<8x32xf32>,
      %cst_29 = arith.constant 0.000000e+00 : f32
      %30 = vector.broadcast %cst_29 : f32 to vector<8x32xf32>
      %c0_30 = arith.constant 0 : index
      %c0_31 = arith.constant 0 : index
      %31 = vector.load %arg11[%c0_30, %c0_31] : memref<8x32xf32, #tpu.memory_space<vmem>>, vector<8x32xf32>
      tpu.vector_store %arg11[%c0_30, %c0_31], %30 {strides = array<i32>} : memref<8x32xf32, #tpu.memory_space<vmem>>, vector<8x32xf32>,
      %cst_32 = arith.constant 0.000000e+00 : f32
      %32 = vector.broadcast %cst_32 : f32 to vector<8x1xf32>
      %c0_33 = arith.constant 0 : index
      %c0_34 = arith.constant 0 : index
      %33 = vector.load %arg12[%c0_33, %c0_34] : memref<8x1xf32, #tpu.memory_space<vmem>>, vector<8x1xf32>
      tpu.vector_store %arg12[%c0_33, %c0_34], %32 {strides = array<i32>} : memref<8x1xf32, #tpu.memory_space<vmem>>, vector<8x1xf32>,
    } else {
    }
    %c0 = arith.constant 0 : index
    %c0_1 = arith.constant 0 : index
    %3 = vector.load %arg10[%c0, %c0_1] : memref<8x32xf32, #tpu.memory_space<vmem>>, vector<8x32xf32>
    %c0_2 = arith.constant 0 : index
    %c0_3 = arith.constant 0 : index
    %4 = vector.load %arg3[%c0_2, %c0_3] : memref<32x128xf32, #tpu.memory_space<vmem>>, vector<32x128xf32>
    %cst = arith.constant dense<0.000000e+00> : vector<8x128xf32>
    %5 = tpu.matmul %3, %4, %cst {dimension_numbers = #tpu.dot_dimension_numbers<[1], [0], [0], [1], [0, 0, 1, 1], [], []>} : vector<8x32xf32>, vector<32x128xf32>, vector<8x128xf32> -> vector<8x128xf32>
    %c0_4 = arith.constant 0 : index
    %c0_5 = arith.constant 0 : index
    %6 = vector.load %arg4[%c0_4, %c0_5] : memref<1x128xf32, #tpu.memory_space<vmem>>, vector<1x128xf32>
    %7 = vector.broadcast %6 : vector<1x128xf32> to vector<8x128xf32>
    %8 = arith.addf %5, %7 : vector<8x128xf32>
    %cst_6 = arith.constant 0.000000e+00 : f32
    %9 = vector.broadcast %cst_6 : f32 to vector<8x128xf32>
    %10 = arith.maximumf %8, %9 : vector<8x128xf32>
    %c0_7 = arith.constant 0 : index
    %c0_8 = arith.constant 0 : index
    %11 = vector.load %arg7[%c0_7, %c0_8] : memref<8x128xf32, #tpu.memory_space<vmem>>, vector<8x128xf32>
    tpu.vector_store %arg7[%c0_7, %c0_8], %10 {strides = array<i32>} : memref<8x128xf32, #tpu.memory_space<vmem>>, vector<8x128xf32>,
    %c0_9 = arith.constant 0 : index
    %c0_10 = arith.constant 0 : index
    %12 = vector.load %arg12[%c0_9, %c0_10] : memref<8x1xf32, #tpu.memory_space<vmem>>, vector<8x1xf32>
    %cst_11 = arith.constant dense<0.000000e+00> : vector<8xf32>
    %13 = vector.multi_reduction <add>, %10, %cst_11 [1] : vector<8x128xf32> to vector<8xf32>
    %14 = vector.shape_cast %13 : vector<8xf32> to vector<8x1xf32>
    %15 = arith.addf %12, %14 : vector<8x1xf32>
    %c0_12 = arith.constant 0 : index
    %c0_13 = arith.constant 0 : index
    %16 = vector.load %arg12[%c0_12, %c0_13] : memref<8x1xf32, #tpu.memory_space<vmem>>, vector<8x1xf32>
    tpu.vector_store %arg12[%c0_12, %c0_13], %15 {strides = array<i32>} : memref<8x1xf32, #tpu.memory_space<vmem>>, vector<8x1xf32>,
    %c0_14 = arith.constant 0 : index
    %c0_15 = arith.constant 0 : index
    %17 = vector.load %arg11[%c0_14, %c0_15] : memref<8x32xf32, #tpu.memory_space<vmem>>, vector<8x32xf32>
    %c0_16 = arith.constant 0 : index
    %c0_17 = arith.constant 0 : index
    %18 = vector.load %arg5[%c0_16, %c0_17] : memref<128x32xf32, #tpu.memory_space<vmem>>, vector<128x32xf32>
    %cst_18 = arith.constant dense<0.000000e+00> : vector<8x32xf32>
    %19 = tpu.matmul %10, %18, %cst_18 {dimension_numbers = #tpu.dot_dimension_numbers<[1], [0], [0], [1], [0, 0, 1, 1], [], []>} : vector<8x128xf32>, vector<128x32xf32>, vector<8x32xf32> -> vector<8x32xf32>
    %20 = arith.addf %17, %19 : vector<8x32xf32>
    %c0_19 = arith.constant 0 : index
    %c0_20 = arith.constant 0 : index
    %21 = vector.load %arg11[%c0_19, %c0_20] : memref<8x32xf32, #tpu.memory_space<vmem>>, vector<8x32xf32>
    tpu.vector_store %arg11[%c0_19, %c0_20], %20 {strides = array<i32>} : memref<8x32xf32, #tpu.memory_space<vmem>>, vector<8x32xf32>,
    %c0_i32_21 = arith.constant 0 : i32
    %22 = arith.cmpi eq, %arg1, %c0_i32_21 : i32
    %23 = arith.extui %22 : i1 to i32
    %c0_i32_22 = arith.constant 0 : i32
    %24 = arith.cmpi ne, %23, %c0_i32_22 : i32
    scf.if %24 {
      %c0_23 = arith.constant 0 : index
      %c0_24 = arith.constant 0 : index
      %25 = vector.load %arg2[%c0_23, %c0_24] : memref<8x32xf32, #tpu.memory_space<vmem>>, vector<8x32xf32>
      %c0_25 = arith.constant 0 : index
      %c0_26 = arith.constant 0 : index
      %26 = vector.load %arg11[%c0_25, %c0_26] : memref<8x32xf32, #tpu.memory_space<vmem>>, vector<8x32xf32>
      %c0_27 = arith.constant 0 : index
      %c0_28 = arith.constant 0 : index
      %27 = vector.load %arg6[%c0_27, %c0_28] : memref<1x32xf32, #tpu.memory_space<vmem>>, vector<1x32xf32>
      %28 = vector.broadcast %27 : vector<1x32xf32> to vector<8x32xf32>
      %29 = arith.addf %26, %28 : vector<8x32xf32>
      %30 = arith.subf %25, %29 : vector<8x32xf32>
      %c0_29 = arith.constant 0 : index
      %c0_30 = arith.constant 0 : index
      %31 = vector.load %arg12[%c0_29, %c0_30] : memref<8x1xf32, #tpu.memory_space<vmem>>, vector<8x1xf32>
      %32 = arith.mulf %30, %30 : vector<8x32xf32>
      %33 = vector.shape_cast %32 : vector<8x32xf32> to vector<1x8x32xf32>
      %cst_31 = arith.constant dense<0.000000e+00> : vector<1xf32>
      %34 = vector.multi_reduction <add>, %33, %cst_31 [1, 2] : vector<1x8x32xf32> to vector<1xf32>
      %35 = vector.shape_cast %34 : vector<1xf32> to vector<1x1x1xf32>
      %36 = vector.extract %35[0, 0, 0] : f32 from vector<1x1x1xf32>
      %37 = vector.shape_cast %31 : vector<8x1xf32> to vector<1x8x1xf32>
      %cst_32 = arith.constant dense<0.000000e+00> : vector<1xf32>
      %38 = vector.multi_reduction <add>, %37, %cst_32 [1, 2] : vector<1x8x1xf32> to vector<1xf32>
      %39 = vector.shape_cast %38 : vector<1xf32> to vector<1x1x1xf32>
      %40 = vector.extract %39[0, 0, 0] : f32 from vector<1x1x1xf32>
      %41 = vector.broadcast %36 : f32 to vector<1x8x128xf32>
      %c0_33 = arith.constant 0 : index
      %c0_34 = arith.constant 0 : index
      %c0_35 = arith.constant 0 : index
      %42 = vector.load %arg8[%c0_33, %c0_34, %c0_35] : memref<1x8x128xf32, #tpu.memory_space<vmem>>, vector<1x8x128xf32>
      tpu.vector_store %arg8[%c0_33, %c0_34, %c0_35], %41 {strides = array<i32>} : memref<1x8x128xf32, #tpu.memory_space<vmem>>, vector<1x8x128xf32>,
      %43 = vector.broadcast %40 : f32 to vector<1x8x128xf32>
      %c0_36 = arith.constant 0 : index
      %c0_37 = arith.constant 0 : index
      %c0_38 = arith.constant 0 : index
      %44 = vector.load %arg9[%c0_36, %c0_37, %c0_38] : memref<1x8x128xf32, #tpu.memory_space<vmem>>, vector<1x8x128xf32>
      tpu.vector_store %arg9[%c0_36, %c0_37, %c0_38], %43 {strides = array<i32>} : memref<1x8x128xf32, #tpu.memory_space<vmem>>, vector<1x8x128xf32>,
    } else {
    }
    return
  }
  func.func @transform_0(%arg0: i32, %arg1: i32) -> (i32, i32) {
    %c0_i32 = arith.constant 0 : i32
    %c0_i32_0 = arith.constant 0 : i32
    return %arg0, %c0_i32 : i32, i32
  }
  func.func @transform_1(%arg0: i32, %arg1: i32) -> (i32, i32) {
    %c0_i32 = arith.constant 0 : i32
    %c0_i32_0 = arith.constant 0 : i32
    return %c0_i32, %arg1 : i32, i32
  }
  func.func @transform_2(%arg0: i32, %arg1: i32) -> (i32, i32) {
    %c0_i32 = arith.constant 0 : i32
    %c0_i32_0 = arith.constant 0 : i32
    return %c0_i32, %arg1 : i32, i32
  }
  func.func @transform_3(%arg0: i32, %arg1: i32) -> (i32, i32) {
    %c0_i32 = arith.constant 0 : i32
    %c0_i32_0 = arith.constant 0 : i32
    return %arg1, %c0_i32 : i32, i32
  }
  func.func @transform_4(%arg0: i32, %arg1: i32) -> (i32, i32) {
    %c0_i32 = arith.constant 0 : i32
    %c0_i32_0 = arith.constant 0 : i32
    %c0_i32_1 = arith.constant 0 : i32
    return %c0_i32, %c0_i32_0 : i32, i32
  }
  func.func @transform_5(%arg0: i32, %arg1: i32) -> (i32, i32) {
    %c0_i32 = arith.constant 0 : i32
    return %arg0, %arg1 : i32, i32
  }
  func.func @transform_6(%arg0: i32, %arg1: i32) -> (i32, i32, i32) {
    %c0_i32 = arith.constant 0 : i32
    %c0_i32_0 = arith.constant 0 : i32
    %c0_i32_1 = arith.constant 0 : i32
    return %arg0, %c0_i32, %c0_i32_0 : i32, i32, i32
  }
  func.func @transform_7(%arg0: i32, %arg1: i32) -> (i32, i32, i32) {
    %c0_i32 = arith.constant 0 : i32
    %c0_i32_0 = arith.constant 0 : i32
    %c0_i32_1 = arith.constant 0 : i32
    return %arg0, %c0_i32, %c0_i32_0 : i32, i32, i32
  }
}

</mosaic_0001>

<llo_original>
// kernel: lswt_sae_forward.1
$region0: #{lswt_sae_forward.1}
  #allocation0 [shape = 'u32[]', space=smem, size = 0x4, offset = 0x4, fixed_abs, tag = 'smem constant byte address 0x4 - core index']
  #allocation1 [shape = 'u32[144,128]{1,0:T(1,128)}', space=vmem, size = 0x12000, scoped, tag = 'internal scratch']
  #allocation2 [shape = 'f32[8,32]{1,0:T(8,128)}', space=vmem, size = 0x1000, scoped, tag = 'scratch operand']
  #allocation3 [shape = 'f32[8,32]{1,0:T(8,128)}', space=vmem, size = 0x1000, scoped, tag = 'scratch operand']
  #allocation4 [shape = 'f32[8,1]{1,0:T(8,128)}', space=vmem, size = 0x1000, scoped, tag = 'scratch operand']
  %s0 = inlined_call_operand.vmem [shape: f32[16,32], index: 0, kind: input, shape index: {}]
  %s1 = inlined_call_operand.vmem [shape: f32[32,128], index: 1, kind: input, shape index: {}]
  %s2 = inlined_call_operand.vmem [shape: f32[1,128], index: 2, kind: input, shape index: {}]
  %s3 = inlined_call_operand.vmem [shape: f32[128,32], index: 3, kind: input, shape index: {}]
  %s4 = inlined_call_operand.vmem [shape: f32[1,32], index: 4, kind: input, shape index: {}]
  %s5 = inlined_call_operand.vmem [shape: f32[16,128], index: 5, kind: output, shape index: {0}]
  %s6 = inlined_call_operand.vmem [shape: f32[2,8,128], index: 6, kind: output, shape index: {1}]
  %s7 = inlined_call_operand.vmem [shape: f32[2,8,128], index: 7, kind: output, shape index: {2}]
  %8 = xla_tuple %s5, %s6, %s7
  %s9 = sld [smem:[#allocation0]]
  $region77: #{lswt_sae_forward.1} parent=0
    _
  %s11 = ssub.s32 1, %s9
  %s12 = scalar_select 0, %s11, %s9
  loop: start=0, step=1, limit=4
  $region2: #{lswt_sae_forward.1} parent=0 // loop_pre_header
    _
  $region3: #{lswt_sae_forward.1} parent=0 // loop_header
    %s14 = sphi 0, %s18
    %p15 = scmp.ge.s32.totalorder %s14, 4
    %s21 = sphi 0, %s33
    %s22 = sphi 0, %s29
    %s23 = sphi 0, %s21
    %s24 = sphi 0, %s22
    %s25 = sphi 0, %s23
    %s26 = sphi 0, %s24
    %s36 = sphi 0, %s38
    %s39 = sphi 0, %s36
    %s40 = sphi 0, %s39
    %s56 = sphi 0, %s40
    %s62 = sphi 0, %s64
    %s65 = sphi 0, %s62
    %s66 = sphi 0, %s65
    %s82 = sphi 0, %s66
    %s88 = sphi 0, %s90
    %s91 = sphi 0, %s88
    %s92 = sphi 0, %s91
    %s108 = sphi 0, %s92
    %s114 = sphi 0, %s116
    %s117 = sphi 0, %s114
    %s118 = sphi 0, %s117
    %s134 = sphi 0, %s118
    %s138 = sphi 0, %s138
    %s140 = sphi 0, %s138
    %s141 = sphi 0, %s140
    %s155 = sphi 0, %s141
    %s163 = sphi 0, %s165
    %s166 = sphi 0, %s163
    %s167 = sphi 0, %s166
    %s183 = sphi 0, %s167
    %s189 = sphi 0, %s191
    %s192 = sphi 0, %s189
    %s193 = sphi 0, %s192
    %s209 = sphi 0, %s193
    %s215 = sphi 0, %s217
    %s218 = sphi 0, %s215
    %s219 = sphi 0, %s218
    %s235 = sphi 0, %s219
  $region4: #{lswt_sae_forward.1} parent=0 // loop_header_branch
    %17 = sbr.rel (%p15) target = $region8
  $region5: #{lswt_sae_forward.1} parent=0 // loop_body
    %s19 = ssub.s32 %s14, 1
    %s20 = ssub.s32 %s14, 2
    %s27 = sadd.s32 1, %s22
    %p28 = scmp.ge.s32.totalorder %s27, 1
    %s29 = scalar_select %p28, 0, %s27
    %s30 = sadd.s32 1, %s21
    %s31 = scalar_select %p28, %s30, %s21
    %p32 = scmp.ge.s32.totalorder %s31, 2
    %s33 = scalar_select %p32, 0, %s31
    %s34 = ssub.s32 %s21, %s33
    %p35 = scmp.eq.s32.totalorder %s34, 0
    %s37 = sadd.s32 %s36, 1
    %s38 = scalar_select %p35, %s36, %s37
    %p41 = pneg %p35
    %p42 = scmp.eq.s32.totalorder %s14, 1
    %p43 = por %p41, %p42
    %p44 = scmp.ne.s32.totalorder %s36, %s39
    %p45 = scmp.eq.s32.totalorder %s14, 0
    %p46 = por %p44, %p45
    %p47 = scmp.ne.s32.totalorder %s36, %s39
    %p48 = scmp.eq.s32.totalorder %s19, 1
    %p49 = por %p47, %p48
    %p50 = scmp.ne.s32.totalorder %s39, %s40
    %p51 = scmp.eq.s32.totalorder %s19, 0
    %p52 = por %p50, %p51
    %p53 = scmp.ne.s32.totalorder %s39, %s40
    %p54 = scmp.eq.s32.totalorder %s20, 1
    %p55 = por %p53, %p54
    %p57 = scmp.ne.s32.totalorder %s40, %s56
    %p58 = scmp.eq.s32.totalorder %s20, 0
    %p59 = por %p57, %p58
    %s60 = ssub.s32 %s22, %s29
    %p61 = scmp.eq.s32.totalorder %s60, 0
    %s63 = sadd.s32 %s62, 1
    %s64 = scalar_select %p61, %s62, %s63
    %p67 = pneg %p61
    %p68 = scmp.eq.s32.totalorder %s14, 1
    %p69 = por %p67, %p68
    %p70 = scmp.ne.s32.totalorder %s62, %s65
    %p71 = scmp.eq.s32.totalorder %s14, 0
    %p72 = por %p70, %p71
    %p73 = scmp.ne.s32.totalorder %s62, %s65
    %p74 = scmp.eq.s32.totalorder %s19, 1
    %p75 = por %p73, %p74
    %p76 = scmp.ne.s32.totalorder %s65, %s66
    %p77 = scmp.eq.s32.totalorder %s19, 0
    %p78 = por %p76, %p77
    %p79 = scmp.ne.s32.totalorder %s65, %s66
    %p80 = scmp.eq.s32.totalorder %s20, 1
    %p81 = por %p79, %p80
    %p83 = scmp.ne.s32.totalorder %s66, %s82
    %p84 = scmp.eq.s32.totalorder %s20, 0
    %p85 = por %p83, %p84
    %s86 = ssub.s32 %s22, %s29
    %p87 = scmp.eq.s32.totalorder %s86, 0
    %s89 = sadd.s32 %s88, 1
    %s90 = scalar_select %p87, %s88, %s89
    %p93 = pneg %p87
    %p94 = scmp.eq.s32.totalorder %s14, 1
    %p95 = por %p93, %p94
    %p96 = scmp.ne.s32.totalorder %s88, %s91
    %p97 = scmp.eq.s32.totalorder %s14, 0
    %p98 = por %p96, %p97
    %p99 = scmp.ne.s32.totalorder %s88, %s91
    %p100 = scmp.eq.s32.totalorder %s19, 1
    %p101 = por %p99, %p100
    %p102 = scmp.ne.s32.totalorder %s91, %s92
    %p103 = scmp.eq.s32.totalorder %s19, 0
    %p104 = por %p102, %p103
    %p105 = scmp.ne.s32.totalorder %s91, %s92
    %p106 = scmp.eq.s32.totalorder %s20, 1
    %p107 = por %p105, %p106
    %p109 = scmp.ne.s32.totalorder %s92, %s108
    %p110 = scmp.eq.s32.totalorder %s20, 0
    %p111 = por %p109, %p110
    %s112 = ssub.s32 %s22, %s29
    %p113 = scmp.eq.s32.totalorder %s112, 0
    %s115 = sadd.s32 %s114, 1
    %s116 = scalar_select %p113, %s114, %s115
    %p119 = pneg %p113
    %p120 = scmp.eq.s32.totalorder %s14, 1
    %p121 = por %p119, %p120
    %p122 = scmp.ne.s32.totalorder %s114, %s117
    %p123 = scmp.eq.s32.totalorder %s14, 0
    %p124 = por %p122, %p123
    %p125 = scmp.ne.s32.totalorder %s114, %s117
    %p126 = scmp.eq.s32.totalorder %s19, 1
    %p127 = por %p125, %p126
    %p128 = scmp.ne.s32.totalorder %s117, %s118
    %p129 = scmp.eq.s32.totalorder %s19, 0
    %p130 = por %p128, %p129
    %p131 = scmp.ne.s32.totalorder %s117, %s118
    %p132 = scmp.eq.s32.totalorder %s20, 1
    %p133 = por %p131, %p132
    %p135 = scmp.ne.s32.totalorder %s118, %s134
    %p136 = scmp.eq.s32.totalorder %s20, 0
    %p137 = por %p135, %p136
    %s139 = sadd.s32 %s138, 1
    %p142 = scmp.eq.s32.totalorder %s14, 1
    %p143 = scmp.ne.s32.totalorder %s138, %s140
    %p144 = scmp.eq.s32.totalorder %s14, 0
    %p145 = por %p143, %p144
    %p146 = scmp.ne.s32.totalorder %s138, %s140
    %p147 = scmp.eq.s32.totalorder %s19, 1
    %p148 = por %p146, %p147
    %p149 = scmp.ne.s32.totalorder %s140, %s141
    %p150 = scmp.eq.s32.totalorder %s19, 0
    %p151 = por %p149, %p150
    %p152 = scmp.ne.s32.totalorder %s140, %s141
    %p153 = scmp.eq.s32.totalorder %s20, 1
    %p154 = por %p152, %p153
    %p156 = scmp.ne.s32.totalorder %s141, %s155
    %p157 = scmp.eq.s32.totalorder %s20, 0
    %p158 = por %p156, %p157
    %s159 = ssub.s32 %s21, %s33
    %s160 = ssub.s32 %s22, %s29
    %s161 = sor.u32 %s159, %s160
    %p162 = scmp.eq.s32.totalorder %s161, 0
    %s164 = sadd.s32 %s163, 1
    %s165 = scalar_select %p162, %s163, %s164
    %p168 = pneg %p162
    %p169 = scmp.eq.s32.totalorder %s14, 1
    %p170 = por %p168, %p169
    %p171 = scmp.ne.s32.totalorder %s163, %s166
    %p172 = scmp.eq.s32.totalorder %s14, 0
    %p173 = por %p171, %p172
    %p174 = scmp.ne.s32.totalorder %s163, %s166
    %p175 = scmp.eq.s32.totalorder %s19, 1
    %p176 = por %p174, %p175
    %p177 = scmp.ne.s32.totalorder %s166, %s167
    %p178 = scmp.eq.s32.totalorder %s19, 0
    %p179 = por %p177, %p178
    %p180 = scmp.ne.s32.totalorder %s166, %s167
    %p181 = scmp.eq.s32.totalorder %s20, 1
    %p182 = por %p180, %p181
    %p184 = scmp.ne.s32.totalorder %s167, %s183
    %p185 = scmp.eq.s32.totalorder %s20, 0
    %p186 = por %p184, %p185
    %s187 = ssub.s32 %s21, %s33
    %p188 = scmp.eq.s32.totalorder %s187, 0
    %s190 = sadd.s32 %s189, 1
    %s191 = scalar_select %p188, %s189, %s190
    %p194 = pneg %p188
    %p195 = scmp.eq.s32.totalorder %s14, 1
    %p196 = por %p194, %p195
    %p197 = scmp.ne.s32.totalorder %s189, %s192
    %p198 = scmp.eq.s32.totalorder %s14, 0
    %p199 = por %p197, %p198
    %p200 = scmp.ne.s32.totalorder %s189, %s192
    %p201 = scmp.eq.s32.totalorder %s19, 1
    %p202 = por %p200, %p201
    %p203 = scmp.ne.s32.totalorder %s192, %s193
    %p204 = scmp.eq.s32.totalorder %s19, 0
    %p205 = por %p203, %p204
    %p206 = scmp.ne.s32.totalorder %s192, %s193
    %p207 = scmp.eq.s32.totalorder %s20, 1
    %p208 = por %p206, %p207
    %p210 = scmp.ne.s32.totalorder %s193, %s209
    %p211 = scmp.eq.s32.totalorder %s20, 0
    %p212 = por %p210, %p211
    %s213 = ssub.s32 %s21, %s33
    %p214 = scmp.eq.s32.totalorder %s213, 0
    %s216 = sadd.s32 %s215, 1
    %s217 = scalar_select %p214, %s215, %s216
    %p220 = pneg %p214
    %p221 = scmp.eq.s32.totalorder %s14, 1
    %p222 = por %p220, %p221
    %p223 = scmp.ne.s32.totalorder %s215, %s218
    %p224 = scmp.eq.s32.totalorder %s14, 0
    %p225 = por %p223, %p224
    %p226 = scmp.ne.s32.totalorder %s215, %s218
    %p227 = scmp.eq.s32.totalorder %s19, 1
    %p228 = por %p226, %p227
    %p229 = scmp.ne.s32.totalorder %s218, %s219
    %p230 = scmp.eq.s32.totalorder %s19, 0
    %p231 = por %p229, %p230
    %p232 = scmp.ne.s32.totalorder %s218, %s219
    %p233 = scmp.eq.s32.totalorder %s20, 1
    %p234 = por %p232, %p233
    %p236 = scmp.ne.s32.totalorder %s219, %s235
    %p237 = scmp.eq.s32.totalorder %s20, 0
    %p238 = por %p236, %p237
    %p239 = scmp.le.s32.totalorder 1, %s14
    %p240 = scmp.lt.s32.totalorder %s14, 3
    %p241 = pnand %p239, %p240
    %p242 = pneg %p241
    // Predicated region
    $region9: #{lswt_sae_forward.1} parent=5 // pred_check
      _
    $region10: #{lswt_sae_forward.1} parent=5 // pred_check_branch
      %244 = sbr.rel (%p241) target = $region12
    $region11: #{lswt_sae_forward.1} parent=5 // pred_region
      %s245 = ssub.s32 %s14, 1
      // Predicated region
      $region13: #{lswt_sae_forward.1} parent=11 // pred_check
        %p246 = pneg %p78
      $region14: #{lswt_sae_forward.1} parent=11 // pred_check_branch
        %248 = sbr.rel (%p246) target = $region16
      $region15: #{lswt_sae_forward.1} parent=11 // pred_region
        %p249 = scmp.lt.s32.totalorder %s24, 0
        %s250 = scalar_select %p249, %s24, 0
        %s251 = smul.addr %s250, 8
        %s252 = scalar_lea.vmem %s1, %s251
      $region16: #{lswt_sae_forward.1} parent=11 // pred_fallthru
        _
      // Predicated region
      $region17: #{lswt_sae_forward.1} parent=11 // pred_check
        %p253 = pneg %p104
      $region18: #{lswt_sae_forward.1} parent=11 // pred_check_branch
        %255 = sbr.rel (%p253) target = $region20
      $region19: #{lswt_sae_forward.1} parent=11 // pred_region
        %p256 = scmp.lt.s32.totalorder %s24, 0
        %s257 = scalar_select %p256, %s24, 0
        %s258 = scalar_lea.vmem %s2, %s257
      $region20: #{lswt_sae_forward.1} parent=11 // pred_fallthru
        _
      // Predicated region
      $region21: #{lswt_sae_forward.1} parent=11 // pred_check
        %p259 = pneg %p130
      $region22: #{lswt_sae_forward.1} parent=11 // pred_check_branch
        %261 = sbr.rel (%p259) target = $region24
      $region23: #{lswt_sae_forward.1} parent=11 // pred_region
        %s262 = smul.u32 16, %s24
        %p263 = scmp.lt.s32.totalorder %s262, 15
        %s264 = scalar_select %p263, %s262, 15
        %s265 = smul.addr %s264, 8
        %s266 = scalar_lea.vmem %s3, %s265
        %s267 = smul.u32 16, %s24
      $region24: #{lswt_sae_forward.1} parent=11 // pred_fallthru
        _
      // Predicated region
      $region25: #{lswt_sae_forward.1} parent=11 // pred_check
        %p268 = pneg %p151
      $region26: #{lswt_sae_forward.1} parent=11 // pred_check_branch
        %270 = sbr.rel (%p268) target = $region28
      $region27: #{lswt_sae_forward.1} parent=11 // pred_region
        _
      $region28: #{lswt_sae_forward.1} parent=11 // pred_fallthru
        _
    $region12: #{lswt_sae_forward.1} parent=5 // pred_fallthru
      _
    %p271 = scmp.lt.s32.totalorder %s14, 2
    // Predicated region
    $region29: #{lswt_sae_forward.1} parent=5 // pred_check
      %p272 = pneg %p271
    $region30: #{lswt_sae_forward.1} parent=5 // pred_check_branch
      %274 = sbr.rel (%p272) target = $region32
    $region31: #{lswt_sae_forward.1} parent=5 // pred_region
      // Predicated region
      $region33: #{lswt_sae_forward.1} parent=31 // pred_check
        %p275 = pneg %p46
      $region34: #{lswt_sae_forward.1} parent=31 // pred_check_branch
        %277 = sbr.rel (%p275) target = $region36
      $region35: #{lswt_sae_forward.1} parent=31 // pred_region
        %p278 = scmp.lt.s32.totalorder %s21, 1
        %s279 = scalar_select %p278, %s21, 1
        %s280 = smul.addr %s279, 8
        %s281 = scalar_lea.vmem %s0, %s280
      $region36: #{lswt_sae_forward.1} parent=31 // pred_fallthru
        _
    $region32: #{lswt_sae_forward.1} parent=5 // pred_fallthru
      _
    %p282 = scmp.le.s32.totalorder 1, %s14
    %p283 = scmp.lt.s32.totalorder %s14, 3
    %p284 = pnand %p282, %p283
    %p285 = pneg %p284
    // Predicated region
    $region37: #{lswt_sae_forward.1} parent=5 // pred_check
      _
    $region38: #{lswt_sae_forward.1} parent=5 // pred_check_branch
      %287 = sbr.rel (%p284) target = $region40
    $region39: #{lswt_sae_forward.1} parent=5 // pred_region
      %s288 = ssub.s32 %s14, 1
      %p289 = scmp.lt.s32.totalorder %s23, 1
      %s290 = scalar_select %p289, %s23, 1
      %s291 = smul.addr %s290, 8
      %s292 = scalar_lea.vmem %s0, %s291
      %p293 = pneg %p52
      %p294 = pneg %p49
      %p295 = scmp.lt.s32.totalorder %s24, 0
      %s296 = scalar_select %p295, %s24, 0
      %s297 = smul.addr %s296, 8
      %s298 = scalar_lea.vmem %s1, %s297
      %p299 = pneg %p78
      %p300 = pneg %p75
      %p301 = scmp.lt.s32.totalorder %s24, 0
      %s302 = scalar_select %p301, %s24, 0
      %s303 = scalar_lea.vmem %s2, %s302
      %p304 = pneg %p104
      %p305 = pneg %p101
      %s306 = smul.u32 16, %s24
      %p307 = scmp.lt.s32.totalorder %s306, 15
      %s308 = scalar_select %p307, %s306, 15
      %s309 = smul.addr %s308, 8
      %s310 = scalar_lea.vmem %s3, %s309
      %p311 = pneg %p130
      %p312 = pneg %p127
      %p313 = pneg %p151
      %p314 = pneg %p148
      %p315 = pneg %p179
      %p316 = pneg %p176
      %p317 = scmp.lt.s32.totalorder %s23, 1
      %s318 = scalar_select %p317, %s23, 1
      %p319 = scmp.lt.s32.totalorder %s24, 0
      %s320 = scalar_select %p319, %s24, 0
      %s321 = sadd.s32 %s320, %s318
      %s322 = smul.addr %s321, 8
      %s323 = scalar_lea.vmem %s5, %s322
      %p324 = pneg %p205
      %p325 = pneg %p202
      %p326 = scmp.lt.s32.totalorder %s23, 1
      %s327 = scalar_select %p326, %s23, 1
      %s328 = smul.addr %s327, 8
      %s329 = scalar_lea.vmem %s6, %s328
      %p330 = pneg %p231
      %p331 = pneg %p228
      %p332 = scmp.lt.s32.totalorder %s23, 1
      %s333 = scalar_select %p332, %s23, 1
      %s334 = smul.addr %s333, 8
      %s335 = scalar_lea.vmem %s7, %s334
      %p336 = scmp.lt.s32.totalorder %s23, 1
      %s337 = scalar_select %p336, %s23, 1
      %s338 = smul.addr %s337, 8
      %s339 = scalar_lea.vmem %s0, %s338
      %p340 = scmp.lt.s32.totalorder %s24, 0
      %s341 = scalar_select %p340, %s24, 0
      %s342 = smul.addr %s341, 8
      %s343 = scalar_lea.vmem %s1, %s342
      %p344 = scmp.lt.s32.totalorder %s24, 0
      %s345 = scalar_select %p344, %s24, 0
      %s346 = scalar_lea.vmem %s2, %s345
      %s347 = smul.u32 16, %s24
      %p348 = scmp.lt.s32.totalorder %s347, 15
      %s349 = scalar_select %p348, %s347, 15
      %s350 = smul.addr %s349, 8
      %s351 = scalar_lea.vmem %s3, %s350
      %s352 = smul.u32 16, %s24
      %p353 = scmp.lt.s32.totalorder %s23, 1
      %s354 = scalar_select %p353, %s23, 1
      %p355 = scmp.lt.s32.totalorder %s24, 0
      %s356 = scalar_select %p355, %s24, 0
      %s357 = sadd.s32 %s356, %s354
      %s358 = smul.addr %s357, 8
      %s359 = scalar_lea.vmem %s5, %s358
      %p360 = scmp.lt.s32.totalorder %s23, 1
      %s361 = scalar_select %p360, %s23, 1
      %s362 = smul.addr %s361, 8
      %s363 = scalar_lea.vmem %s6, %s362
      %p364 = scmp.lt.s32.totalorder %s23, 1
      %s365 = scalar_select %p364, %s23, 1
      %s366 = smul.addr %s365, 8
      %s367 = scalar_lea.vmem %s7, %s366
      %p368 = scmp.eq.s32.totalorder %s24, 0
      // Predicated region
      $region41: #{lswt_sae_forward.1} parent=39 // pred_check
        %p369 = pneg %p368
      $region42: #{lswt_sae_forward.1} parent=39 // pred_check_branch
        %371 = sbr.rel (%p369) target = $region44
      $region43: #{lswt_sae_forward.1} parent=39 // pred_region
        %v372 = vld [vmem:[%s339] sm:$0xff]
        %v373 = vld [vmem:[%s4] sm:$0x1]
        %v375 = vlaneseq
        %v376 = vshrl.u32 %v375, 7
        %v377 = vsub.s32 0, %v376
        %v378 = vrot.slane %v373, %v377
        %v380 = vsub.f32 %v372, %v378
        %vm381 = vcmask 261120
        %382 = vst.msk [vmem:[#allocation2] sm:$0xff] %vm381, %v380
        %383 = vst.msk [vmem:[#allocation3] sm:$0xff] %vm381, 0.0
        %vm384 = vcmask 7168
        %385 = vst.msk [vmem:[#allocation4] sm:$0xff] %vm384, 0.0
      $region44: #{lswt_sae_forward.1} parent=39 // pred_fallthru
        _
      %v386 = vld [vmem:[#allocation2] sm:$0xff]
      %v387 = vld [vmem:[%s343] sm:$0xff]
      %v388 = vld [vmem:[%s343 + $0x8] sm:$0xff]
      %v389 = vld [vmem:[%s343 + $0x10] sm:$0xff]
      %v390 = vld [vmem:[%s343 + $0x18] sm:$0xff]
      %v391 = vld [vmem:[%s346] sm:$0x1]
      %v393 = vlaneseq
      %v394 = vshrl.u32 %v393, 7
      %v395 = vsub.s32 0, %v394
      %v396 = vrot.slane %v391, %v395
      %vm398 = vcmask 261120
      %v400 = vsel %vm398, %v386, 0
      %402 = vmatprep.subr.mxu0 0.0
      %403 = vmatpush1.msra.mxu0 %v387
      %404 = vmatprep.subr.mxu0 0.0
      %405 = vmatpush1.msra.mxu0 %v388
      %406 = vmatprep.subr.mxu0 0.0
      %407 = vmatpush1.msra.mxu0 %v389
      %408 = vmatprep.subr.mxu0 0.0
      %409 = vmatpush1.msra.mxu0 %v390
      %410 = vmatprep.subr.mxu0 0.0
      %411 = vmatpush1.msra.mxu0 0.0
      %412 = vmatprep.subr.mxu0 0.0
      %413 = vmatpush1.msra.mxu0 0.0
      %414 = vmatprep.subr.mxu0 0.0
      %415 = vmatpush1.msra.mxu0 0.0
      %416 = vmatprep.subr.mxu0 0.0
      %417 = vmatpush1.msra.mxu0 0.0
      %418 = vmatprep.subr.mxu0 0.0
      %419 = vmatpush1.msra.mxu0 0.0
      %420 = vmatprep.subr.mxu0 0.0
      %421 = vmatpush1.msra.mxu0 0.0
      %422 = vmatprep.subr.mxu0 0.0
      %423 = vmatpush1.msra.mxu0 0.0
      %424 = vmatprep.subr.mxu0 0.0
      %425 = vmatpush1.msra.mxu0 0.0
      %426 = vmatprep.subr.mxu0 0.0
      %427 = vmatpush1.msra.mxu0 0.0
      %428 = vmatprep.subr.mxu0 0.0
      %429 = vmatpush1.msra.mxu0 0.0
      %430 = vmatprep.subr.mxu0 0.0
      %431 = vmatpush1.msra.mxu0 0.0
      %432 = vmatprep.subr.mxu0 0.0
      %433 = vmatpush1.msra.mxu0 0.0
      %434 = vmatprep.subr.mxu0 0.0
      %435 = vmatpush1.msra.mxu0 0.0
      %436 = vmatprep.subr.mxu0 0.0
      %437 = vmatpush1.msra.mxu0 0.0
      %438 = vmatprep.subr.mxu0 0.0
      %439 = vmatpush1.msra.mxu0 0.0
      %440 = vmatprep.subr.mxu0 0.0
      %441 = vmatpush1.msra.mxu0 0.0
      %442 = vmatprep.subr.mxu0 0.0
      %443 = vmatpush1.msra.mxu0 0.0
      %444 = vmatprep.subr.mxu0 0.0
      %445 = vmatpush1.msra.mxu0 0.0
      %446 = vmatprep.subr.mxu0 0.0
      %447 = vmatpush1.msra.mxu0 0.0
      %448 = vmatprep.subr.mxu0 0.0
      %449 = vmatpush1.msra.mxu0 0.0
      %450 = vmatprep.subr.mxu0 0.0
      %451 = vmatpush1.msra.mxu0 0.0
      %452 = vmatprep.subr.mxu0 0.0
      %453 = vmatpush1.msra.mxu0 0.0
      %454 = vmatprep.subr.mxu0 0.0
      %455 = vmatpush1.msra.mxu0 0.0
      %456 = vmatprep.subr.mxu0 0.0
      %457 = vmatpush1.msra.mxu0 0.0
      %458 = vmatprep.subr.mxu0 0.0
      %459 = vmatpush1.msra.mxu0 0.0
      %460 = vmatprep.subr.mxu0 0.0
      %461 = vmatpush1.msra.mxu0 0.0
      %462 = vmatprep.subr.mxu0 0.0
      %463 = vmatpush1.msra.mxu0 0.0
      %464 = vmatprep.subr.mxu0 0.0
      %465 = vmatpush1.msra.mxu0 0.0
      %466 = vmatprep.mubr.f32.mxu0 0.0
      %467 = vmatmul.mubr.f32.gmra.mrb[0].mxu0 %v400
      %v468 = vpop.f32.mrb[0].mxu0
      %v469 = vadd.f32 %v396, %v468
      %v470 = vpop.f32.mrb[0].mxu0
      %471 = vdwg.mxu0
      %v472 = vmax.f32 %v469, 0.0
      %473 = vst [vmem:[%s359] sm:$0xff] %v472
      %v474 = vld [vmem:[#allocation4] sm:$0xff]
      %475 = vadd.xlane.f32.xlu0 %v472
      %v476 = vpop.xlane.xlu0 %475
      %v477 = vadd.f32 %v474, %v476
      %vm478 = vcmask 7168
      %479 = vst.msk [vmem:[#allocation4] sm:$0xff] %vm478, %v477
      %v480 = vld [vmem:[#allocation3] sm:$0xff]
      %v481 = vld [vmem:[%s351] sm:$0xff]
      %v482 = vld [vmem:[%s351 + $0x8] sm:$0xff]
      %v483 = vld [vmem:[%s351 + $0x10] sm:$0xff]
      %v484 = vld [vmem:[%s351 + $0x18] sm:$0xff]
      %v485 = vld [vmem:[%s351 + $0x20] sm:$0xff]
      %v486 = vld [vmem:[%s351 + $0x28] sm:$0xff]
      %v487 = vld [vmem:[%s351 + $0x30] sm:$0xff]
      %v488 = vld [vmem:[%s351 + $0x38] sm:$0xff]
      %v489 = vld [vmem:[%s351 + $0x40] sm:$0xff]
      %v490 = vld [vmem:[%s351 + $0x48] sm:$0xff]
      %v491 = vld [vmem:[%s351 + $0x50] sm:$0xff]
      %v492 = vld [vmem:[%s351 + $0x58] sm:$0xff]
      %v493 = vld [vmem:[%s351 + $0x60] sm:$0xff]
      %v494 = vld [vmem:[%s351 + $0x68] sm:$0xff]
      %v495 = vld [vmem:[%s351 + $0x70] sm:$0xff]
      %v496 = vld [vmem:[%s351 + $0x78] sm:$0xff]
      %497 = vmatprep.subr.mxu0 0.0
      %498 = vmatpush1.msra.mxu0 %v481
      %499 = vmatprep.subr.mxu0 0.0
      %500 = vmatpush1.msra.mxu0 %v482
      %501 = vmatprep.subr.mxu0 0.0
      %502 = vmatpush1.msra.mxu0 %v483
      %503 = vmatprep.subr.mxu0 0.0
      %504 = vmatpush1.msra.mxu0 %v484
      %505 = vmatprep.subr.mxu0 0.0
      %506 = vmatpush1.msra.mxu0 %v485
      %507 = vmatprep.subr.mxu0 0.0
      %508 = vmatpush1.msra.mxu0 %v486
      %509 = vmatprep.subr.mxu0 0.0
      %510 = vmatpush1.msra.mxu0 %v487
      %511 = vmatprep.subr.mxu0 0.0
      %512 = vmatpush1.msra.mxu0 %v488
      %513 = vmatprep.subr.mxu0 0.0
      %514 = vmatpush1.msra.mxu0 %v489
      %515 = vmatprep.subr.mxu0 0.0
      %516 = vmatpush1.msra.mxu0 %v490
      %517 = vmatprep.subr.mxu0 0.0
      %518 = vmatpush1.msra.mxu0 %v491
      %519 = vmatprep.subr.mxu0 0.0
      %520 = vmatpush1.msra.mxu0 %v492
      %521 = vmatprep.subr.mxu0 0.0
      %522 = vmatpush1.msra.mxu0 %v493
      %523 = vmatprep.subr.mxu0 0.0
      %524 = vmatpush1.msra.mxu0 %v494
      %525 = vmatprep.subr.mxu0 0.0
      %526 = vmatpush1.msra.mxu0 %v495
      %527 = vmatprep.subr.mxu0 0.0
      %528 = vmatpush1.msra.mxu0 %v496
      %529 = vmatprep.subr.mxu0 0.0
      %530 = vmatpush1.msra.mxu0 0.0
      %531 = vmatprep.subr.mxu0 0.0
      %532 = vmatpush1.msra.mxu0 0.0
      %533 = vmatprep.subr.mxu0 0.0
      %534 = vmatpush1.msra.mxu0 0.0
      %535 = vmatprep.subr.mxu0 0.0
      %536 = vmatpush1.msra.mxu0 0.0
      %537 = vmatprep.subr.mxu0 0.0
      %538 = vmatpush1.msra.mxu0 0.0
      %539 = vmatprep.subr.mxu0 0.0
      %540 = vmatpush1.msra.mxu0 0.0
      %541 = vmatprep.subr.mxu0 0.0
      %542 = vmatpush1.msra.mxu0 0.0
      %543 = vmatprep.subr.mxu0 0.0
      %544 = vmatpush1.msra.mxu0 0.0
      %545 = vmatprep.subr.mxu0 0.0
      %546 = vmatpush1.msra.mxu0 0.0
      %547 = vmatprep.subr.mxu0 0.0
      %548 = vmatpush1.msra.mxu0 0.0
      %549 = vmatprep.subr.mxu0 0.0
      %550 = vmatpush1.msra.mxu0 0.0
      %551 = vmatprep.subr.mxu0 0.0
      %552 = vmatpush1.msra.mxu0 0.0
      %553 = vmatprep.subr.mxu0 0.0
      %554 = vmatpush1.msra.mxu0 0.0
      %555 = vmatprep.subr.mxu0 0.0
      %556 = vmatpush1.msra.mxu0 0.0
      %557 = vmatprep.subr.mxu0 0.0
      %558 = vmatpush1.msra.mxu0 0.0
      %559 = vmatprep.subr.mxu0 0.0
      %560 = vmatpush1.msra.mxu0 0.0
      %561 = vmatprep.mubr.f32.mxu0 0.0
      %562 = vmatmul.mubr.f32.gmra.mrb[0].mxu0 %v472
      %v563 = vpop.f32.mrb[0].mxu0
      %v564 = vadd.f32 0.0, %v563
      %v565 = vpop.f32.mrb[0].mxu0
      %566 = vdwg.mxu0
      %v567 = vadd.f32 %v480, %v564
      %568 = vst.msk [vmem:[#allocation3] sm:$0xff] %vm398, %v567
      // Predicated region
      $region45: #{lswt_sae_forward.1} parent=39 // pred_check
        %p569 = pneg %p368
      $region46: #{lswt_sae_forward.1} parent=39 // pred_check_branch
        %571 = sbr.rel (%p569) target = $region48
      $region47: #{lswt_sae_forward.1} parent=39 // pred_region
        %v572 = vld [vmem:[%s339] sm:$0xff]
        %v573 = vld [vmem:[#allocation3] sm:$0xff]
        %v574 = vld [vmem:[%s4] sm:$0x1]
        %v576 = vlaneseq
        %v577 = vshrl.u32 %v576, 7
        %v578 = vsub.s32 0, %v577
        %v579 = vrot.slane %v574, %v578
        %v581 = vadd.f32 %v573, %v579
        %v582 = vsub.f32 %v572, %v581
        %v583 = vld [vmem:[#allocation4] sm:$0xff]
        %v584 = vmul.f32 %v582, %v582
        %v585 = vsel %vm398, %v584, 0.0
        %586 = vadd.xlane.f32.xlu0 %v585
        %v587 = vpop.xlane.xlu0 %586
        %v588 = vrot.slane %v587, 4
        %v589 = vadd.f32 %v587, %v588
        %v590 = vrot.slane %v589, 2
        %v591 = vadd.f32 %v589, %v590
        %v592 = vrot.slane %v591, 1
        %v593 = vadd.f32 %v591, %v592
        %s594 = vtos %v593
        %v595 = vsel %vm478, %v583, 0.0
        %596 = vadd.xlane.f32.xlu0 %v595
        %v597 = vpop.xlane.xlu0 %596
        %v598 = vrot.slane %v597, 4
        %v599 = vadd.f32 %v597, %v598
        %v600 = vrot.slane %v599, 2
        %v601 = vadd.f32 %v599, %v600
        %v602 = vrot.slane %v601, 1
        %v603 = vadd.f32 %v601, %v602
        %s604 = vtos %v603
        %v605 = vstv %s594
        %606 = vst [vmem:[%s363] sm:$0xff] %v605
        %v607 = vstv %s604
        %608 = vst [vmem:[%s367] sm:$0xff] %v607
      $region48: #{lswt_sae_forward.1} parent=39 // pred_fallthru
        _
      %p609 = scmp.lt.s32.totalorder %s23, 1
      %s610 = scalar_select %p609, %s23, 1
      %p611 = scmp.lt.s32.totalorder %s24, 0
      %s612 = scalar_select %p611, %s24, 0
      %s613 = sadd.s32 %s612, %s610
      %s614 = smul.addr %s613, 8
      %s615 = scalar_lea.vmem %s5, %s614
      %p616 = scmp.lt.s32.totalorder %s23, 1
      %s617 = scalar_select %p616, %s23, 1
      %s618 = smul.addr %s617, 8
      %s619 = scalar_lea.vmem %s6, %s618
      %p620 = scmp.lt.s32.totalorder %s23, 1
      %s621 = scalar_select %p620, %s23, 1
      %s622 = smul.addr %s621, 8
      %s623 = scalar_lea.vmem %s7, %s622
      // Predicated region
      $region49: #{lswt_sae_forward.1} parent=39 // pred_check
        %p624 = pneg %p176
      $region50: #{lswt_sae_forward.1} parent=39 // pred_check_branch
        %626 = sbr.rel (%p624) target = $region52
      $region51: #{lswt_sae_forward.1} parent=39 // pred_region
        _
      $region52: #{lswt_sae_forward.1} parent=39 // pred_fallthru
        _
      // Predicated region
      $region53: #{lswt_sae_forward.1} parent=39 // pred_check
        %p627 = pneg %p202
      $region54: #{lswt_sae_forward.1} parent=39 // pred_check_branch
        %629 = sbr.rel (%p627) target = $region56
      $region55: #{lswt_sae_forward.1} parent=39 // pred_region
        _
      $region56: #{lswt_sae_forward.1} parent=39 // pred_fallthru
        _
      // Predicated region
      $region57: #{lswt_sae_forward.1} parent=39 // pred_check
        %p630 = pneg %p228
      $region58: #{lswt_sae_forward.1} parent=39 // pred_check_branch
        %632 = sbr.rel (%p630) target = $region60
      $region59: #{lswt_sae_forward.1} parent=39 // pred_region
        _
      $region60: #{lswt_sae_forward.1} parent=39 // pred_fallthru
        _
    $region40: #{lswt_sae_forward.1} parent=5 // pred_fallthru
      _
    %p633 = scmp.le.s32.totalorder 2, %s14
    // Predicated region
    $region61: #{lswt_sae_forward.1} parent=5 // pred_check
      %p634 = pneg %p633
    $region62: #{lswt_sae_forward.1} parent=5 // pred_check_branch
      %636 = sbr.rel (%p634) target = $region64
    $region63: #{lswt_sae_forward.1} parent=5 // pred_region
      %s637 = ssub.s32 %s14, 2
      // Predicated region
      $region65: #{lswt_sae_forward.1} parent=63 // pred_check
        %p638 = pneg %p182
      $region66: #{lswt_sae_forward.1} parent=63 // pred_check_branch
        %640 = sbr.rel (%p638) target = $region68
      $region67: #{lswt_sae_forward.1} parent=63 // pred_region
        %p641 = scmp.lt.s32.totalorder %s25, 1
        %s642 = scalar_select %p641, %s25, 1
        %p643 = scmp.lt.s32.totalorder %s26, 0
        %s644 = scalar_select %p643, %s26, 0
        %s645 = sadd.s32 %s644, %s642
        %s646 = smul.addr %s645, 8
        %s647 = scalar_lea.vmem %s5, %s646
      $region68: #{lswt_sae_forward.1} parent=63 // pred_fallthru
        _
      // Predicated region
      $region69: #{lswt_sae_forward.1} parent=63 // pred_check
        %p648 = pneg %p208
      $region70: #{lswt_sae_forward.1} parent=63 // pred_check_branch
        %650 = sbr.rel (%p648) target = $region72
      $region71: #{lswt_sae_forward.1} parent=63 // pred_region
        %p651 = scmp.lt.s32.totalorder %s25, 1
        %s652 = scalar_select %p651, %s25, 1
        %s653 = smul.addr %s652, 8
        %s654 = scalar_lea.vmem %s6, %s653
      $region72: #{lswt_sae_forward.1} parent=63 // pred_fallthru
        _
      // Predicated region
      $region73: #{lswt_sae_forward.1} parent=63 // pred_check
        %p655 = pneg %p234
      $region74: #{lswt_sae_forward.1} parent=63 // pred_check_branch
        %657 = sbr.rel (%p655) target = $region76
      $region75: #{lswt_sae_forward.1} parent=63 // pred_region
        %p658 = scmp.lt.s32.totalorder %s25, 1
        %s659 = scalar_select %p658, %s25, 1
        %s660 = smul.addr %s659, 8
        %s661 = scalar_lea.vmem %s7, %s660
      $region76: #{lswt_sae_forward.1} parent=63 // pred_fallthru
        _
    $region64: #{lswt_sae_forward.1} parent=5 // pred_fallthru
      _
  $region6: #{lswt_sae_forward.1} parent=0 // loop_footer
    %s18 = sadd.s32 1, %s14
  $region7: #{lswt_sae_forward.1} parent=0 // loop_footer_branch
    %13 = sbr.rel target = $region3
  $region8: #{lswt_sae_forward.1} parent=0 // loop_exit
    _

</llo_original>
